<compile_context>
chip_gen: v7x
topology: tpu7x:2x2x1
jax: 0.10.0
libtpu: 0.0.40
codegen_flags: <defaults>
</compile_context>

<pallas_src>
import math

import jax
import jax.numpy as jnp
from jax.experimental import pallas as pl
from jax.experimental.pallas import tpu as pltpu

BN_EPS = 1e-5


def _round_up(x, m):
    return ((x + m - 1) // m) * m


def _cdiv(a, b):
    return -(-a // b)


def _tpu_plan():
    """Branch VMEM limit / tile-size target on chip generation (v7x: 64 MiB VMEM)."""
    try:
        cap = pltpu.get_tpu_info().vmem_capacity_bytes
    except Exception:
        cap = 64 * 1024 * 1024
    if cap >= 100 * 1024 * 1024:           # v5e / v6e: 128 MiB physical VMEM
        return 96 * 1024 * 1024, 1024
    return 40 * 1024 * 1024, 512           # v7x: 64 MiB physical VMEM


_VMEM_LIMIT, _M_TARGET = _tpu_plan()
_CONV_M_SPLIT = 2                          # leading "parallel" axis (v7x megacore)


def _plan_m(m, n_split, target):
    """Pick a tile size minimizing padding while amortizing per-grid-step overhead."""
    n_tiles = max(n_split, _round_up(_cdiv(m, target), n_split))
    tm = _round_up(_cdiv(m, n_tiles), 8)
    return tm, n_tiles * tm, n_tiles


# ---------------------------------------------------------------------------
# Pallas kernels
# ---------------------------------------------------------------------------
def conv_matmul_stats(patches, w_t, bias, m_valid, tm, n_split):
    """Tiled conv-as-matmul (bf16 MXU operands, f32 accumulation).

    Also accumulates per-channel sum / sum-of-squares (masked to the first
    `m_valid` rows) for training-mode BatchNorm statistics.  The M axis is
    split into `n_split` "parallel" halves so v7x's two TensorCores each run
    one half; each half emits its own partial-stats slab which bn_relu reduces.
    """
    m_pad, kdim = patches.shape
    cout_p = w_t.shape[1]
    g_inner = m_pad // (n_split * tm)

    def kernel(p_ref, w_ref, b_ref, y_ref, s_ref, acc_ref):
        c = pl.program_id(0)
        i = pl.program_id(1)
        y = jnp.dot(p_ref[...], w_ref[...],
                    preferred_element_type=jnp.float32) + b_ref[...]
        y_ref[...] = y

        # Mask padded rows out of the BN statistics.
        row = (c * g_inner + i) * tm + jax.lax.broadcasted_iota(jnp.int32, (tm, 1), 0)
        yv = jnp.where(row < m_valid, y, 0.0)

        @pl.when(i == 0)
        def _():
            acc_ref[...] = jnp.zeros_like(acc_ref)

        # Single fused accumulate into VMEM scratch; HBM store deferred to the
        # last grid step (no per-step sub-row read-modify-write stores).
        acc_ref[...] += jnp.concatenate(
            [jnp.sum(yv, axis=0, keepdims=True),
             jnp.sum(yv * yv, axis=0, keepdims=True)], axis=0)

        @pl.when(i == pl.num_programs(1) - 1)
        def _():
            s_ref[...] = acc_ref[...][None]

    return pl.pallas_call(
        kernel,
        out_shape=(jax.ShapeDtypeStruct((m_pad, cout_p), jnp.float32),
                   jax.ShapeDtypeStruct((n_split, 2, cout_p), jnp.float32)),
        grid_spec=pltpu.PrefetchScalarGridSpec(
            num_scalar_prefetch=0,
            grid=(n_split, g_inner),
            in_specs=[
                pl.BlockSpec((tm, kdim), lambda c, i: (c * g_inner + i, 0)),
                pl.BlockSpec((kdim, cout_p), lambda c, i: (0, 0)),
                pl.BlockSpec((1, cout_p), lambda c, i: (0, 0)),
            ],
            out_specs=[
                pl.BlockSpec((tm, cout_p), lambda c, i: (c * g_inner + i, 0)),
                pl.BlockSpec((1, 2, cout_p), lambda c, i: (c, 0, 0)),
            ],
            scratch_shapes=[pltpu.VMEM((2, cout_p), jnp.float32)],
        ),
        compiler_params=pltpu.CompilerParams(
            dimension_semantics=("parallel", "arbitrary"),
            vmem_limit_bytes=_VMEM_LIMIT),
    )(patches, w_t, bias)


def bn_relu(y, stats, gamma, beta, m_valid, tm):
    """Tiled training-mode BatchNorm (reducing per-core partial stats) + ReLU."""
    m_pad, cout_p = y.shape
    n_split = stats.shape[0]
    inv_m = 1.0 / float(m_valid)

    def kernel(y_ref, s_ref, g_ref, b_ref, o_ref):
        s = jnp.sum(s_ref[...], axis=0)                 # reduce per-core partials
        mean = s[0:1, :] * inv_m
        # TODO(synk): one-pass E[x^2]-E[x]^2 in f32 can lose precision for very
        # large M; a centered second pass would match PyTorch more tightly.
        var = jnp.maximum(s[1:2, :] * inv_m - mean * mean, 0.0)
        scale = g_ref[...] * jax.lax.rsqrt(var + BN_EPS)
        shift = b_ref[...] - mean * scale
        o_ref[...] = jnp.maximum(y_ref[...] * scale + shift, 0.0)

    return pl.pallas_call(
        kernel,
        out_shape=jax.ShapeDtypeStruct((m_pad, cout_p), jnp.float32),
        grid_spec=pltpu.PrefetchScalarGridSpec(
            num_scalar_prefetch=0,
            grid=(m_pad // tm,),
            in_specs=[
                pl.BlockSpec((tm, cout_p), lambda i: (i, 0)),
                pl.BlockSpec((n_split, 2, cout_p), lambda i: (0, 0, 0)),
                pl.BlockSpec((1, cout_p), lambda i: (0, 0)),
                pl.BlockSpec((1, cout_p), lambda i: (0, 0)),
            ],
            out_specs=pl.BlockSpec((tm, cout_p), lambda i: (i, 0)),
        ),
        compiler_params=pltpu.CompilerParams(
            dimension_semantics=("parallel",),
            vmem_limit_bytes=_VMEM_LIMIT),
    )(y, stats, gamma, beta)


def matmul_bias(x, w_t, bias):
    """Tiled y = x @ w_t + bias with bf16 MXU operands (hoisted GRU input proj)."""
    m, k = x.shape
    n_out = w_t.shape[1]
    tm, m_pad, _ = _plan_m(m, 1, _M_TARGET)
    if m_pad != m:
        x = jnp.pad(x, ((0, m_pad - m), (0, 0)))
    x = x.astype(jnp.bfloat16)
    w_b = w_t.astype(jnp.bfloat16)

    def kernel(x_ref, w_ref, b_ref, o_ref):
        o_ref[...] = jnp.dot(x_ref[...], w_ref[...],
                             preferred_element_type=jnp.float32) + b_ref[...]

    out = pl.pallas_call(
        kernel,
        out_shape=jax.ShapeDtypeStruct((m_pad, n_out), jnp.float32),
        grid_spec=pltpu.PrefetchScalarGridSpec(
            num_scalar_prefetch=0,
            grid=(m_pad // tm,),
            in_specs=[
                pl.BlockSpec((tm, k), lambda i: (i, 0)),
                pl.BlockSpec((k, n_out), lambda i: (0, 0)),
                pl.BlockSpec((1, n_out), lambda i: (0, 0)),
            ],
            out_specs=pl.BlockSpec((tm, n_out), lambda i: (i, 0)),
        ),
        compiler_params=pltpu.CompilerParams(
            dimension_semantics=("parallel",),
            vmem_limit_bytes=_VMEM_LIMIT),
    )(x, w_b, bias)
    return out[:m]


def gru_recurrent(gx, w_hh_t, b_hh, hidden, t_chunk):
    """Streaming GRU recurrence.

    gx     : [T_pad, N_pad, 3H] f32 input-side gate preactivations (r|z|n),
             already including b_ih.
    w_hh_t : [H, 3H] bf16 fused hidden weights (columns ordered r|z|n).
    b_hh   : [1, 3H] f32 hidden biases.

    Time is streamed in chunks over an "arbitrary" grid; the hidden state is
    carried across chunks in a persistent VMEM scratch, so the resident VMEM
    footprint is O(t_chunk * N * H) regardless of T.  Returns memory
    [T_pad, N_pad, H]; h_T is memory[T-1] (sliced by the caller).
    """
    t_pad, n_pad, g3 = gx.shape

    def kernel(gx_ref, whh_ref, bhh_ref, mem_ref, h_ref):
        @pl.when(pl.program_id(0) == 0)
        def _():
            h_ref[...] = jnp.zeros_like(h_ref)          # default h0 = 0

        whh = whh_ref[...]
        bhh = bhh_ref[...]

        def step(t, h):
            gxt = gx_ref[t]                              # [N_pad, 3H]
            gh = jnp.dot(h.astype(jnp.bfloat16), whh,
                         preferred_element_type=jnp.float32) + bhh
            r = jax.nn.sigmoid(gxt[:, :hidden] + gh[:, :hidden])
            z = jax.nn.sigmoid(gxt[:, hidden:2 * hidden] + gh[:, hidden:2 * hidden])
            nv = jnp.tanh(gxt[:, 2 * hidden:] + r * gh[:, 2 * hidden:])
            h_new = (1.0 - z) * nv + z * h
            mem_ref[pl.ds(t, 1)] = h_new[None]           # VMEM store, streamed out
            return h_new

        h_ref[...] = jax.lax.fori_loop(0, t_chunk, step, h_ref[...], unroll=4)

    return pl.pallas_call(
        kernel,
        out_shape=jax.ShapeDtypeStruct((t_pad, n_pad, hidden), jnp.float32),
        grid_spec=pltpu.PrefetchScalarGridSpec(
            num_scalar_prefetch=0,
            grid=(t_pad // t_chunk,),
            in_specs=[
                pl.BlockSpec((t_chunk, n_pad, g3), lambda t: (t, 0, 0)),
                pl.BlockSpec((hidden, g3), lambda t: (0, 0)),
                pl.BlockSpec((1, g3), lambda t: (0, 0)),
            ],
            out_specs=pl.BlockSpec((t_chunk, n_pad, hidden), lambda t: (t, 0, 0)),
            scratch_shapes=[pltpu.VMEM((n_pad, hidden), jnp.float32)],
        ),
        compiler_params=pltpu.CompilerParams(
            dimension_semantics=("arbitrary",),
            vmem_limit_bytes=_VMEM_LIMIT),
    )(gx, w_hh_t, b_hh)


# ---------------------------------------------------------------------------
# Layout glue (NHWC): coord channels, im2col, parameters
# ---------------------------------------------------------------------------
def add_coords_nhwc(x):
    # CoordConv AddCoords(with_r=True): xx varies along H, yy along W, both
    # normalized to [-1, 1]; rr = sqrt((xx-0.5)^2 + (yy-0.5)^2). Concat order
    # matches the reference: [x, xx, yy, rr].
    n, h, w, _ = x.shape
    xx = (jnp.arange(h, dtype=jnp.float32) / (h - 1)) * 2.0 - 1.0
    yy = (jnp.arange(w, dtype=jnp.float32) / (w - 1)) * 2.0 - 1.0
    xx = jnp.broadcast_to(xx[:, None], (h, w))
    yy = jnp.broadcast_to(yy[None, :], (h, w))
    rr = jnp.sqrt((xx - 0.5) ** 2 + (yy - 0.5) ** 2)
    extra = jnp.broadcast_to(jnp.stack([xx, yy, rr], axis=-1)[None], (n, h, w, 3))
    return jnp.concatenate([x, extra], axis=-1)


def im2col_nhwc(x, kh=3, kw=3, stride=(1, 2), pad=(1, 1)):
    n, h, w, c = x.shape
    xp = jnp.pad(x, ((0, 0), (pad[0], pad[0]), (pad[1], pad[1]), (0, 0)))
    ho = (h - kh + 2 * pad[0]) // stride[0] + 1
    wo = (w - kw + 2 * pad[1]) // stride[1] + 1
    cols = []
    for i in range(kh):
        for j in range(kw):
            patch = jax.lax.slice(
                xp, (0, i, j, 0),
                (n, i + (ho - 1) * stride[0] + 1, j + (wo - 1) * stride[1] + 1, c),
                (1, stride[0], stride[1], 1))
            cols.append(patch)                    # [N, Ho, Wo, C]
    col = jnp.stack(cols, axis=3)                 # [N, Ho, Wo, 9, C]
    return col.reshape(n * ho * wo, kh * kw * c), ho, wo


def init_params(key, ref_enc_filters, prosody_embedding_dim, n_mels):
    k_layers = len(ref_enc_filters)
    hidden = prosody_embedding_dim * 2
    keys = jax.random.split(key, 2 * k_layers + 4)
    in_chs = [1 + 3] + list(ref_enc_filters[:-1])   # CoordConv adds xx, yy, rr
    convs = []
    for i in range(k_layers):
        cin, cout = in_chs[i], ref_enc_filters[i]
        bound = 1.0 / math.sqrt(cin * 9)
        w = jax.random.uniform(keys[2 * i], (cout, cin, 3, 3),
                               minval=-bound, maxval=bound, dtype=jnp.float32)
        b = jax.random.uniform(keys[2 * i + 1], (cout,),
                               minval=-bound, maxval=bound, dtype=jnp.float32)
        gamma = jnp.ones((cout,), jnp.float32)       # BN default init
        beta = jnp.zeros((cout,), jnp.float32)
        convs.append((w, b, gamma, beta, i == 0))

    # GRU input size, exactly like calculate_channels()
    L = n_mels
    for _ in range(k_layers):
        L = (L - 3 + 2) // 2 + 1
    f = ref_enc_filters[-1] * L

    stdv = 1.0 / math.sqrt(hidden)
    gk = keys[2 * k_layers:]
    w_ih = jax.random.uniform(gk[0], (3 * hidden, f), minval=-stdv, maxval=stdv,
                              dtype=jnp.float32)
    w_hh = jax.random.uniform(gk[1], (3 * hidden, hidden), minval=-stdv, maxval=stdv,
                              dtype=jnp.float32)
    b_ih = jax.random.uniform(gk[2], (3 * hidden,), minval=-stdv, maxval=stdv,
                              dtype=jnp.float32)
    b_hh = jax.random.uniform(gk[3], (3 * hidden,), minval=-stdv, maxval=stdv,
                              dtype=jnp.float32)
    return {
        "convs": convs,
        "hidden": hidden,
        "w_ih_t": jnp.transpose(w_ih),      # [F, 3H], columns r|z|n
        "b_ih": b_ih.reshape(1, -1),        # [1, 3H]
        "w_hh_t": jnp.transpose(w_hh),      # [H, 3H], columns r|z|n (fused gates)
        "b_hh": b_hh.reshape(1, -1),        # [1, 3H]
    }


# ---------------------------------------------------------------------------
# Forward pass
# ---------------------------------------------------------------------------
def reference_encoder_forward(x, params, n_mels):
    n = x.shape[0]
    # PyTorch: inputs.view(N, 1, -1, n_mels)  ==  NHWC [N, Ty, n_mels, 1]
    out = x.reshape(n, -1, n_mels, 1)

    for (w, b, gamma, beta, is_coord) in params["convs"]:
        inp = add_coords_nhwc(out) if is_coord else out
        # TODO(synk): im2col patches are materialized in HBM (9x blow-up); a
        # halo-tile shifted-slice conv kernel would remove that traffic and let
        # this BN+ReLU be folded into the next layer's patch read.
        patches, ho, wo = im2col_nhwc(inp)
        cout = w.shape[0]
        cout_p = _round_up(cout, 128)                 # lane-dense MXU / store width
        kdim = patches.shape[1]
        # weight rearranged to (kh, kw, cin) rows to match NHWC patch order
        w_t = w.transpose(2, 3, 1, 0).reshape(kdim, cout)
        w_t = jnp.pad(w_t, ((0, 0), (0, cout_p - cout))).astype(jnp.bfloat16)
        b_p = jnp.pad(b, (0, cout_p - cout)).reshape(1, -1)
        g_p = jnp.pad(gamma, (0, cout_p - cout)).reshape(1, -1)
        be_p = jnp.pad(beta, (0, cout_p - cout)).reshape(1, -1)

        m = patches.shape[0]
        tm, m_pad, _ = _plan_m(m, _CONV_M_SPLIT, _M_TARGET)
        patches = patches.astype(jnp.bfloat16)
        if m_pad != m:
            patches = jnp.pad(patches, ((0, m_pad - m), (0, 0)))

        y, stats = conv_matmul_stats(patches, w_t, b_p, m, tm, _CONV_M_SPLIT)
        rows = bn_relu(y, stats, g_p, be_p, m, tm)
        out = rows[:m, :cout].reshape(n, ho, wo, cout)            # stay NHWC

    # PyTorch: out.transpose(1,2).view(N, T, C*W)  (feature order = (c, w)).
    # Build features directly time-major [T, N, F] so the recurrence needs no
    # further transpose; pad the batch dim to 8 sublanes for the GRU.
    n_, t_len, wo_, c = out.shape
    feats = jnp.transpose(out, (1, 0, 3, 2)).reshape(t_len, n_, c * wo_)
    n_pad = _round_up(max(n_, 8), 8)
    if n_pad != n_:
        feats = jnp.pad(feats, ((0, 0), (0, n_pad - n_), (0, 0)))

    hidden = params["hidden"]
    # Hoisted input projection for all timesteps in one matmul.
    gx = matmul_bias(feats.reshape(t_len * n_pad, c * wo_),
                     params["w_ih_t"], params["b_ih"])
    gx = gx.reshape(t_len, n_pad, 3 * hidden)

    # Stream the recurrence over T-chunks (bounded VMEM for any sequence length).
    n_chunks = _cdiv(t_len, 64)
    t_chunk = _round_up(_cdiv(t_len, n_chunks), 4)
    t_pad = n_chunks * t_chunk
    if t_pad != t_len:
        gx = jnp.pad(gx, ((0, t_pad - t_len), (0, 0), (0, 0)))

    mem = gru_recurrent(gx, params["w_hh_t"].astype(jnp.bfloat16),
                        params["b_hh"], hidden, t_chunk)          # [T_pad, N_pad, H]
    memory = jnp.transpose(mem[:t_len, :n_], (1, 0, 2))           # [N, T, H]
    h_last = mem[t_len - 1, :n_]                                  # [N, H]
    return memory, h_last                                         # (memory, out.squeeze(0))


if __name__ == "__main__":
    # small hparams: ref_enc_filters=[4,4,8], n_mel_channels=16, prosody_embedding_dim=8
    ref_enc_filters = [4, 4, 8]
    n_mel_channels = 16
    prosody_embedding_dim = 8

    key = jax.random.PRNGKey(0)
    kx, kp = jax.random.split(key)
    # input: [N, n_mels * r, Ty / r], r = 1
    x = jax.random.normal(kx, (2, n_mel_channels, 16), dtype=jnp.float32)

    params = init_params(kp, ref_enc_filters, prosody_embedding_dim, n_mel_channels)
    memory, h_last = reference_encoder_forward(x, params, n_mel_channels)
    jax.block_until_ready((memory, h_last))

    assert memory.shape == (2, 16, prosody_embedding_dim * 2), memory.shape
    assert h_last.shape == (2, prosody_embedding_dim * 2), h_last.shape
    assert bool(jnp.all(jnp.isfinite(memory))) and bool(jnp.all(jnp.isfinite(h_last)))
    print("KERNEL_OK")
</pallas_src>

<mosaic_0001>
module attributes {stable_mosaic.version = 11 : i64} {
  func.func @kernel(%arg0: i32, %arg1: i32, %arg2: memref<128x36xbf16, #tpu.memory_space<vmem>>, %arg3: memref<36x128xbf16, #tpu.memory_space<vmem>>, %arg4: memref<1x128xf32, #tpu.memory_space<vmem>>, %arg5: memref<128x128xf32, #tpu.memory_space<vmem>>, %arg6: memref<1x2x128xf32, #tpu.memory_space<vmem>>, %arg7: memref<2x128xf32, #tpu.memory_space<vmem>>) attributes {dimension_semantics = [#tpu.dimension_semantics<parallel>, #tpu.dimension_semantics<arbitrary>], iteration_bounds = array<i64: 2, 1>, scalar_prefetch = 0 : i64, scratch_operands = 1 : i64, tpu.core_type = #tpu.core_type<tc>, window_params = [{transform_indices = @transform_0, window_bounds = array<i64: 128, 36>}, {pipeline_mode = #tpu.pipeline_mode<synchronous>, transform_indices = @transform_1, window_bounds = array<i64: 36, 128>}, {pipeline_mode = #tpu.pipeline_mode<synchronous>, transform_indices = @transform_2, window_bounds = array<i64: 1, 128>}, {transform_indices = @transform_3, window_bounds = array<i64: 128, 128>}, {transform_indices = @transform_4, window_bounds = array<i64: 1, 2, 128>}]} {
    %c0 = arith.constant 0 : index
    %c0_0 = arith.constant 0 : index
    %0 = vector.load %arg2[%c0, %c0_0] : memref<128x36xbf16, #tpu.memory_space<vmem>>, vector<128x36xbf16>
    %c0_1 = arith.constant 0 : index
    %c0_2 = arith.constant 0 : index
    %1 = vector.load %arg3[%c0_1, %c0_2] : memref<36x128xbf16, #tpu.memory_space<vmem>>, vector<36x128xbf16>
    %cst = arith.constant dense<0.000000e+00> : vector<128x128xf32>
    %2 = tpu.matmul %0, %1, %cst {dimension_numbers = #tpu.dot_dimension_numbers<[1], [0], [0], [1], [0, 0, 1, 1], [], []>} : vector<128x36xbf16>, vector<36x128xbf16>, vector<128x128xf32> -> vector<128x128xf32>
    %c0_3 = arith.constant 0 : index
    %c0_4 = arith.constant 0 : index
    %3 = vector.load %arg4[%c0_3, %c0_4] : memref<1x128xf32, #tpu.memory_space<vmem>>, vector<1x128xf32>
    %4 = vector.broadcast %3 : vector<1x128xf32> to vector<128x128xf32>
    %5 = arith.addf %2, %4 : vector<128x128xf32>
    %c0_5 = arith.constant 0 : index
    %c0_6 = arith.constant 0 : index
    %6 = vector.load %arg5[%c0_5, %c0_6] : memref<128x128xf32, #tpu.memory_space<vmem>>, vector<128x128xf32>
    tpu.vector_store %arg5[%c0_5, %c0_6], %5 {strides = array<i32>} : memref<128x128xf32, #tpu.memory_space<vmem>>, vector<128x128xf32>,
    %c1_i32 = arith.constant 1 : i32
    %7 = arith.muli %arg0, %c1_i32 : i32
    %8 = arith.addi %7, %arg1 : i32
    %c128_i32 = arith.constant 128 : i32
    %9 = arith.muli %8, %c128_i32 : i32
    %10 = tpu.iota {dimensions = array<i32: 0>} : vector<128x1xi32>
    %11 = vector.broadcast %9 : i32 to vector<128x1xi32>
    %12 = arith.addi %11, %10 : vector<128x1xi32>
    %c256_i32 = arith.constant 256 : i32
    %13 = vector.broadcast %c256_i32 : i32 to vector<128x1xi32>
    %14 = arith.cmpi slt, %12, %13 : vector<128x1xi32>
    %cst_7 = arith.constant 0.000000e+00 : f32
    %15 = vector.shape_cast %14 : vector<128x1xi1> to vector<128x1xi1>
    %16 = vector.broadcast %15 : vector<128x1xi1> to vector<128x128xi1>
    %17 = vector.broadcast %cst_7 : f32 to vector<128x128xf32>
    %18 = arith.select %16, %5, %17 : vector<128x128xi1>, vector<128x128xf32>
    %c0_i32 = arith.constant 0 : i32
    %19 = arith.cmpi eq, %arg1, %c0_i32 : i32
    %20 = arith.extui %19 : i1 to i32
    %c0_i32_8 = arith.constant 0 : i32
    %21 = arith.cmpi ne, %20, %c0_i32_8 : i32
    scf.if %21 {
      %cst_17 = arith.constant 0.000000e+00 : f32
      %34 = vector.broadcast %cst_17 : f32 to vector<2x128xf32>
      %c0_18 = arith.constant 0 : index
      %c0_19 = arith.constant 0 : index
      %35 = vector.load %arg7[%c0_18, %c0_19] : memref<2x128xf32, #tpu.memory_space<vmem>>, vector<2x128xf32>
      tpu.vector_store %arg7[%c0_18, %c0_19], %34 {strides = array<i32>} : memref<2x128xf32, #tpu.memory_space<vmem>>, vector<2x128xf32>,
    } else {
    }
    %c0_9 = arith.constant 0 : index
    %c0_10 = arith.constant 0 : index
    %22 = vector.load %arg7[%c0_9, %c0_10] : memref<2x128xf32, #tpu.memory_space<vmem>>, vector<2x128xf32>
    %cst_11 = arith.constant dense<0.000000e+00> : vector<128xf32>
    %23 = vector.multi_reduction <add>, %18, %cst_11 [0] : vector<128x128xf32> to vector<128xf32>
    %24 = vector.shape_cast %23 : vector<128xf32> to vector<1x128xf32>
    %25 = arith.mulf %18, %18 : vector<128x128xf32>
    %cst_12 = arith.constant dense<0.000000e+00> : vector<128xf32>
    %26 = vector.multi_reduction <add>, %25, %cst_12 [0] : vector<128x128xf32> to vector<128xf32>
    %27 = vector.shape_cast %26 : vector<128xf32> to vector<1x128xf32>
    %28 = tpu.concatenate %24, %27 in 0 : vector<1x128xf32>, vector<1x128xf32> -> vector<2x128xf32>
    %29 = arith.addf %22, %28 : vector<2x128xf32>
    %c0_13 = arith.constant 0 : index
    %c0_14 = arith.constant 0 : index
    %30 = vector.load %arg7[%c0_13, %c0_14] : memref<2x128xf32, #tpu.memory_space<vmem>>, vector<2x128xf32>
    tpu.vector_store %arg7[%c0_13, %c0_14], %29 {strides = array<i32>} : memref<2x128xf32, #tpu.memory_space<vmem>>, vector<2x128xf32>,
    %c0_i32_15 = arith.constant 0 : i32
    %31 = arith.cmpi eq, %arg1, %c0_i32_15 : i32
    %32 = arith.extui %31 : i1 to i32
    %c0_i32_16 = arith.constant 0 : i32
    %33 = arith.cmpi ne, %32, %c0_i32_16 : i32
    scf.if %33 {
      %c0_17 = arith.constant 0 : index
      %c0_18 = arith.constant 0 : index
      %34 = vector.load %arg7[%c0_17, %c0_18] : memref<2x128xf32, #tpu.memory_space<vmem>>, vector<2x128xf32>
      %35 = vector.shape_cast %34 : vector<2x128xf32> to vector<1x2x128xf32>
      %c0_19 = arith.constant 0 : index
      %c0_20 = arith.constant 0 : index
      %c0_21 = arith.constant 0 : index
      %36 = vector.load %arg6[%c0_19, %c0_20, %c0_21] : memref<1x2x128xf32, #tpu.memory_space<vmem>>, vector<1x2x128xf32>
      tpu.vector_store %arg6[%c0_19, %c0_20, %c0_21], %35 {strides = array<i32>} : memref<1x2x128xf32, #tpu.memory_space<vmem>>, vector<1x2x128xf32>,
    } else {
    }
    return
  }
  func.func @transform_0(%arg0: i32, %arg1: i32) -> (i32, i32) {
    %c1_i32 = arith.constant 1 : i32
    %0 = arith.muli %arg0, %c1_i32 : i32
    %1 = arith.addi %0, %arg1 : i32
    %c0_i32 = arith.constant 0 : i32
    %c0_i32_0 = arith.constant 0 : i32
    return %1, %c0_i32 : i32, i32
  }
  func.func @transform_1(%arg0: i32, %arg1: i32) -> (i32, i32) {
    %c0_i32 = arith.constant 0 : i32
    %c0_i32_0 = arith.constant 0 : i32
    %c0_i32_1 = arith.constant 0 : i32
    return %c0_i32, %c0_i32_0 : i32, i32
  }
  func.func @transform_2(%arg0: i32, %arg1: i32) -> (i32, i32) {
    %c0_i32 = arith.constant 0 : i32
    %c0_i32_0 = arith.constant 0 : i32
    %c0_i32_1 = arith.constant 0 : i32
    return %c0_i32, %c0_i32_0 : i32, i32
  }
  func.func @transform_3(%arg0: i32, %arg1: i32) -> (i32, i32) {
    %c1_i32 = arith.constant 1 : i32
    %0 = arith.muli %arg0, %c1_i32 : i32
    %1 = arith.addi %0, %arg1 : i32
    %c0_i32 = arith.constant 0 : i32
    %c0_i32_0 = arith.constant 0 : i32
    return %1, %c0_i32 : i32, i32
  }
  func.func @transform_4(%arg0: i32, %arg1: i32) -> (i32, i32, i32) {
    %c0_i32 = arith.constant 0 : i32
    %c0_i32_0 = arith.constant 0 : i32
    %c0_i32_1 = arith.constant 0 : i32
    return %arg0, %c0_i32, %c0_i32_0 : i32, i32, i32
  }
}

</mosaic_0001>

<llo_original>
// kernel: tpu_custom_call.1
$region0: #{tpu_custom_call.1}
  #allocation0 [shape = 'u32[]', space=smem, size = 0x4, offset = 0x4, fixed_abs, tag = 'smem constant byte address 0x4 - core index']
  #allocation1 [shape = 'u32[144,128]{1,0:T(1,128)}', space=vmem, size = 0x12000, scoped, tag = 'internal scratch']
  #allocation2 [shape = 'f32[2,128]{1,0:T(2,128)}', space=vmem, size = 0x400, scoped, tag = 'scratch operand']
  %s0 = inlined_call_operand.vmem [shape: bf16[256,36], index: 0, kind: input, shape index: {}]
  %s1 = inlined_call_operand.vmem [shape: bf16[36,128], index: 1, kind: input, shape index: {}]
  %s2 = inlined_call_operand.vmem [shape: f32[1,128], index: 2, kind: input, shape index: {}]
  %s3 = inlined_call_operand.hbm [shape: f32[256,128], index: 3, kind: output, shape index: {0}]
  %s4 = inlined_call_operand.hbm [shape: f32[2,2,128], index: 4, kind: output, shape index: {1}]
  %5 = xla_tuple %s3, %s4
  %s6 = sld [smem:[#allocation0]]
  $region61: #{tpu_custom_call.1} parent=0
    _
  %s8 = ssub.s32 1, %s6
  %s9 = scalar_select 0, %s8, %s6
  $region1: #{tpu_custom_call.1} parent=0
    #allocation3 [shape = 'u8[131072]{0}', space=vmem, size = 0x20000, scoped, tag = 'output window, operand 0']
    #allocation4 [shape = 's32[2]{0}', space=sflag, size = 0x8, scoped, tag = 'scoped memory for tpu_custom_call.1']
    #allocation5 [shape = 'u8[2048]{0}', space=vmem, size = 0x800, scoped, tag = 'output window, operand 1']
    #allocation6 [shape = 's32[2]{0}', space=sflag, size = 0x8, scoped, tag = 'scoped memory for tpu_custom_call.1']
    %10 = vsyncpa [#allocation4], 0
    %s11 = scalar_lea.sflag [#allocation4], 1
    %12 = vsyncpa %s11, 0
    %13 = vsyncpa [#allocation6], 0
    %s14 = scalar_lea.sflag [#allocation6], 1
    %15 = vsyncpa %s14, 0
    loop: start=0, step=1, limit=4
    $region2: #{tpu_custom_call.1} parent=1 // loop_pre_header
      _
    $region3: #{tpu_custom_call.1} parent=1 // loop_header
      %s17 = sphi 0, %s21
      %p18 = scmp.ge.s32.totalorder %s17, 4
      %s24 = sphi 0, %s36
      %s25 = sphi 0, %s32
      %s26 = sphi 0, %s24
      %s27 = sphi 0, %s25
      %s28 = sphi 0, %s26
      %s29 = sphi 0, %s27
      %s41 = sphi 0, %s43
      %s44 = sphi 0, %s41
      %s45 = sphi 0, %s44
      %s61 = sphi 0, %s45
      %s65 = sphi 0, %s65
      %s67 = sphi 0, %s65
      %s68 = sphi 0, %s67
      %s82 = sphi 0, %s68
      %s86 = sphi 0, %s86
      %s88 = sphi 0, %s86
      %s89 = sphi 0, %s88
      %s103 = sphi 0, %s89
      %s111 = sphi 0, %s113
      %s114 = sphi 0, %s111
      %s115 = sphi 0, %s114
      %s131 = sphi 0, %s115
      %s137 = sphi 0, %s139
      %s140 = sphi 0, %s137
      %s141 = sphi 0, %s140
      %s157 = sphi 0, %s141
    $region4: #{tpu_custom_call.1} parent=1 // loop_header_branch
      %20 = sbr.rel (%p18) target = $region8
    $region5: #{tpu_custom_call.1} parent=1 // loop_body
      %s22 = ssub.s32 %s17, 1
      %s23 = ssub.s32 %s17, 2
      %s30 = sadd.s32 1, %s25
      %p31 = scmp.ge.s32.totalorder %s30, 1
      %s32 = scalar_select %p31, 0, %s30
      %s33 = sadd.s32 1, %s24
      %s34 = scalar_select %p31, %s33, %s24
      %p35 = scmp.ge.s32.totalorder %s34, 2
      %s36 = scalar_select %p35, 0, %s34
      %s37 = sadd.s32 %s24, %s25
      %s38 = sadd.s32 %s36, %s32
      %s39 = ssub.s32 %s37, %s38
      %p40 = scmp.eq.s32.totalorder %s39, 0
      %s42 = sadd.s32 %s41, 1
      %s43 = scalar_select %p40, %s41, %s42
      %p46 = pneg %p40
      %p47 = scmp.eq.s32.totalorder %s17, 1
      %p48 = por %p46, %p47
      %p49 = scmp.ne.s32.totalorder %s41, %s44
      %p50 = scmp.eq.s32.totalorder %s17, 0
      %p51 = por %p49, %p50
      %p52 = scmp.ne.s32.totalorder %s41, %s44
      %p53 = scmp.eq.s32.totalorder %s22, 1
      %p54 = por %p52, %p53
      %p55 = scmp.ne.s32.totalorder %s44, %s45
      %p56 = scmp.eq.s32.totalorder %s22, 0
      %p57 = por %p55, %p56
      %p58 = scmp.ne.s32.totalorder %s44, %s45
      %p59 = scmp.eq.s32.totalorder %s23, 1
      %p60 = por %p58, %p59
      %p62 = scmp.ne.s32.totalorder %s45, %s61
      %p63 = scmp.eq.s32.totalorder %s23, 0
      %p64 = por %p62, %p63
      %s66 = sadd.s32 %s65, 1
      %p69 = scmp.eq.s32.totalorder %s17, 1
      %p70 = scmp.ne.s32.totalorder %s65, %s67
      %p71 = scmp.eq.s32.totalorder %s17, 0
      %p72 = por %p70, %p71
      %p73 = scmp.ne.s32.totalorder %s65, %s67
      %p74 = scmp.eq.s32.totalorder %s22, 1
      %p75 = por %p73, %p74
      %p76 = scmp.ne.s32.totalorder %s67, %s68
      %p77 = scmp.eq.s32.totalorder %s22, 0
      %p78 = por %p76, %p77
      %p79 = scmp.ne.s32.totalorder %s67, %s68
      %p80 = scmp.eq.s32.totalorder %s23, 1
      %p81 = por %p79, %p80
      %p83 = scmp.ne.s32.totalorder %s68, %s82
      %p84 = scmp.eq.s32.totalorder %s23, 0
      %p85 = por %p83, %p84
      %s87 = sadd.s32 %s86, 1
      %p90 = scmp.eq.s32.totalorder %s17, 1
      %p91 = scmp.ne.s32.totalorder %s86, %s88
      %p92 = scmp.eq.s32.totalorder %s17, 0
      %p93 = por %p91, %p92
      %p94 = scmp.ne.s32.totalorder %s86, %s88
      %p95 = scmp.eq.s32.totalorder %s22, 1
      %p96 = por %p94, %p95
      %p97 = scmp.ne.s32.totalorder %s88, %s89
      %p98 = scmp.eq.s32.totalorder %s22, 0
      %p99 = por %p97, %p98
      %p100 = scmp.ne.s32.totalorder %s88, %s89
      %p101 = scmp.eq.s32.totalorder %s23, 1
      %p102 = por %p100, %p101
      %p104 = scmp.ne.s32.totalorder %s89, %s103
      %p105 = scmp.eq.s32.totalorder %s23, 0
      %p106 = por %p104, %p105
      %s107 = sadd.s32 %s24, %s25
      %s108 = sadd.s32 %s36, %s32
      %s109 = ssub.s32 %s107, %s108
      %p110 = scmp.eq.s32.totalorder %s109, 0
      %s112 = sadd.s32 %s111, 1
      %s113 = scalar_select %p110, %s111, %s112
      %p116 = pneg %p110
      %p117 = scmp.eq.s32.totalorder %s17, 1
      %p118 = por %p116, %p117
      %p119 = scmp.ne.s32.totalorder %s111, %s114
      %p120 = scmp.eq.s32.totalorder %s17, 0
      %p121 = por %p119, %p120
      %p122 = scmp.ne.s32.totalorder %s111, %s114
      %p123 = scmp.eq.s32.totalorder %s22, 1
      %p124 = por %p122, %p123
      %p125 = scmp.ne.s32.totalorder %s114, %s115
      %p126 = scmp.eq.s32.totalorder %s22, 0
      %p127 = por %p125, %p126
      %p128 = scmp.ne.s32.totalorder %s114, %s115
      %p129 = scmp.eq.s32.totalorder %s23, 1
      %p130 = por %p128, %p129
      %p132 = scmp.ne.s32.totalorder %s115, %s131
      %p133 = scmp.eq.s32.totalorder %s23, 0
      %p134 = por %p132, %p133
      %s135 = ssub.s32 %s24, %s36
      %p136 = scmp.eq.s32.totalorder %s135, 0
      %s138 = sadd.s32 %s137, 1
      %s139 = scalar_select %p136, %s137, %s138
      %p142 = pneg %p136
      %p143 = scmp.eq.s32.totalorder %s17, 1
      %p144 = por %p142, %p143
      %p145 = scmp.ne.s32.totalorder %s137, %s140
      %p146 = scmp.eq.s32.totalorder %s17, 0
      %p147 = por %p145, %p146
      %p148 = scmp.ne.s32.totalorder %s137, %s140
      %p149 = scmp.eq.s32.totalorder %s22, 1
      %p150 = por %p148, %p149
      %p151 = scmp.ne.s32.totalorder %s140, %s141
      %p152 = scmp.eq.s32.totalorder %s22, 0
      %p153 = por %p151, %p152
      %p154 = scmp.ne.s32.totalorder %s140, %s141
      %p155 = scmp.eq.s32.totalorder %s23, 1
      %p156 = por %p154, %p155
      %p158 = scmp.ne.s32.totalorder %s141, %s157
      %p159 = scmp.eq.s32.totalorder %s23, 0
      %p160 = por %p158, %p159
      %p161 = scmp.le.s32.totalorder 1, %s17
      %p162 = scmp.lt.s32.totalorder %s17, 3
      %p163 = pnand %p161, %p162
      %p164 = pneg %p163
      // Predicated region
      $region9: #{tpu_custom_call.1} parent=5 // pred_check
        _
      $region10: #{tpu_custom_call.1} parent=5 // pred_check_branch
        %166 = sbr.rel (%p163) target = $region12
      $region11: #{tpu_custom_call.1} parent=5 // pred_region
        %s167 = ssub.s32 %s17, 1
        // Predicated region
        $region13: #{tpu_custom_call.1} parent=11 // pred_check
          %p168 = pneg %p78
        $region14: #{tpu_custom_call.1} parent=11 // pred_check_branch
          %170 = sbr.rel (%p168) target = $region16
        $region15: #{tpu_custom_call.1} parent=11 // pred_region
          _
        $region16: #{tpu_custom_call.1} parent=11 // pred_fallthru
          _
        // Predicated region
        $region17: #{tpu_custom_call.1} parent=11 // pred_check
          %p171 = pneg %p99
        $region18: #{tpu_custom_call.1} parent=11 // pred_check_branch
          %173 = sbr.rel (%p171) target = $region20
        $region19: #{tpu_custom_call.1} parent=11 // pred_region
          _
        $region20: #{tpu_custom_call.1} parent=11 // pred_fallthru
          _
      $region12: #{tpu_custom_call.1} parent=5 // pred_fallthru
        _
      %p174 = scmp.lt.s32.totalorder %s17, 2
      // Predicated region
      $region21: #{tpu_custom_call.1} parent=5 // pred_check
        %p175 = pneg %p174
      $region22: #{tpu_custom_call.1} parent=5 // pred_check_branch
        %177 = sbr.rel (%p175) target = $region24
      $region23: #{tpu_custom_call.1} parent=5 // pred_region
        // Predicated region
        $region25: #{tpu_custom_call.1} parent=23 // pred_check
          %p178 = pneg %p51
        $region26: #{tpu_custom_call.1} parent=23 // pred_check_branch
          %180 = sbr.rel (%p178) target = $region28
        $region27: #{tpu_custom_call.1} parent=23 // pred_region
          %s181 = sadd.s32 %s24, %s25
          %s182 = smul.u32 16, %s181
          %p183 = scmp.lt.s32.totalorder %s182, 31
          %s184 = scalar_select %p183, %s182, 31
          %s185 = smul.addr %s184, 4
          %s186 = scalar_lea.vmem %s0, %s185
          %s187 = sadd.s32 %s24, %s25
          %s188 = smul.u32 16, %s187
        $region28: #{tpu_custom_call.1} parent=23 // pred_fallthru
          _
      $region24: #{tpu_custom_call.1} parent=5 // pred_fallthru
        _
      %p189 = scmp.le.s32.totalorder 1, %s17
      %p190 = scmp.lt.s32.totalorder %s17, 3
      %p191 = pnand %p189, %p190
      %p192 = pneg %p191
      // Predicated region
      $region29: #{tpu_custom_call.1} parent=5 // pred_check
        _
      $region30: #{tpu_custom_call.1} parent=5 // pred_check_branch
        %194 = sbr.rel (%p191) target = $region32
      $region31: #{tpu_custom_call.1} parent=5 // pred_region
        %s195 = ssub.s32 %s17, 1
        %s196 = sadd.s32 %s26, %s27
        %s197 = smul.u32 16, %s196
        %p198 = scmp.lt.s32.totalorder %s197, 31
        %s199 = scalar_select %p198, %s197, 31
        %s200 = smul.addr %s199, 4
        %s201 = scalar_lea.vmem %s0, %s200
        %p202 = pneg %p57
        %p203 = pneg %p54
        %p204 = pneg %p78
        %p205 = pneg %p75
        %p206 = pneg %p99
        %p207 = pneg %p96
        %p208 = pneg %p127
        %p209 = pneg %p124
        %s210 = sand.u32 %s114, 1
        %s211 = scalar_lea.sflag [#allocation4], %s210
        %s212 = sand.u32 %s114, 1
        %s213 = smul.addr %s212, 128
        %s214 = scalar_lea.vmem [#allocation3], %s213
        %p215 = pneg %p153
        %p216 = pneg %p150
        %s217 = sand.u32 %s140, 1
        %s218 = scalar_lea.sflag [#allocation6], %s217
        %s219 = sand.u32 %s140, 1
        %s220 = smul.addr %s219, 2
        %s221 = scalar_lea.vmem [#allocation5], %s220
        %s222 = sadd.s32 %s26, %s27
        %s223 = smul.u32 16, %s222
        %p224 = scmp.lt.s32.totalorder %s223, 31
        %s225 = scalar_select %p224, %s223, 31
        %s226 = smul.addr %s225, 4
        %s227 = scalar_lea.vmem %s0, %s226
        %s228 = sadd.s32 %s26, %s27
        %s229 = smul.u32 16, %s228
        %s230 = sadd.s32 %s26, %s27
        %s231 = smul.u32 16, %s230
        %v233 = vld [vmem:[%s227] sm:$0xf]
        %v234 = vld [vmem:[%s227 + $0x4] sm:$0xf]
        %v235 = vld [vmem:[%s227 + $0x8] sm:$0xf]
        %v236 = vld [vmem:[%s227 + $0xc] sm:$0xf]
        %v237 = vld [vmem:[%s227 + $0x10] sm:$0xf]
        %v238 = vld [vmem:[%s227 + $0x14] sm:$0xf]
        %v239 = vld [vmem:[%s227 + $0x18] sm:$0xf]
        %v240 = vld [vmem:[%s227 + $0x1c] sm:$0xf]
        %v241 = vld [vmem:[%s227 + $0x20] sm:$0xf]
        %v242 = vld [vmem:[%s227 + $0x24] sm:$0xf]
        %v243 = vld [vmem:[%s227 + $0x28] sm:$0xf]
        %v244 = vld [vmem:[%s227 + $0x2c] sm:$0xf]
        %v245 = vld [vmem:[%s227 + $0x30] sm:$0xf]
        %v246 = vld [vmem:[%s227 + $0x34] sm:$0xf]
        %v247 = vld [vmem:[%s227 + $0x38] sm:$0xf]
        %v248 = vld [vmem:[%s227 + $0x3c] sm:$0xf]
        %v249 = vld [vmem:[%s1] sm:$0xf]
        %v250 = vld [vmem:[%s1 + $0x4] sm:$0xf]
        %v251 = vld [vmem:[%s1 + $0x8] sm:$0xf]
        %v252 = vld [vmem:[%s1 + $0xc] sm:$0xf]
        %v253 = vld [vmem:[%s1 + $0x10] sm:$0x3]
        %v254 = vld [vmem:[%s2] sm:$0x1]
        %v256 = vlaneseq
        %v257 = vshrl.u32 %v256, 7
        %v258 = vsub.s32 0, %v257
        %v259 = vrot.slane %v254, %v258
        %v277 = vunpack.c.l.b16 %v233
        %v278 = vunpack.c.l.b16 %v234
        %v279 = vunpack.c.l.b16 %v235
        %v280 = vunpack.c.l.b16 %v236
        %v281 = vunpack.c.l.b16 %v237
        %v282 = vunpack.c.l.b16 %v238
        %v283 = vunpack.c.l.b16 %v239
        %v284 = vunpack.c.l.b16 %v240
        %v285 = vunpack.c.l.b16 %v241
        %v286 = vunpack.c.l.b16 %v242
        %v287 = vunpack.c.l.b16 %v243
        %v288 = vunpack.c.l.b16 %v244
        %v289 = vunpack.c.l.b16 %v245
        %v290 = vunpack.c.l.b16 %v246
        %v291 = vunpack.c.l.b16 %v247
        %v292 = vunpack.c.l.b16 %v248
        %v293 = vpack.c.b16 %v278, %v277
        %v294 = vpack.c.b16 %v280, %v279
        %v295 = vpack.c.b16 %v282, %v281
        %v296 = vpack.c.b16 %v284, %v283
        %v297 = vpack.c.b16 %v286, %v285
        %v298 = vpack.c.b16 %v288, %v287
        %v299 = vpack.c.b16 %v290, %v289
        %v300 = vpack.c.b16 %v292, %v291
        %v306 = vunpack.c.l.b16 %v249
        %v307 = vunpack.c.l.b16 %v250
        %v308 = vunpack.c.l.b16 %v251
        %v309 = vunpack.c.l.b16 %v252
        %v310 = vunpack.c.l.b16 %v253
        %v311 = vpack.c.b16 %v307, %v306
        %v312 = vpack.c.b16 %v309, %v308
        %v313 = vpack.c.b16 %v310, %v310
        %vm316 = vcmask 293888
        %v318 = vsel %vm316, %v293, 0
        %v321 = vsel %vm316, %v294, 0
        %v324 = vsel %vm316, %v295, 0
        %v327 = vsel %vm316, %v296, 0
        %v330 = vsel %vm316, %v297, 0
        %v333 = vsel %vm316, %v298, 0
        %v336 = vsel %vm316, %v299, 0
        %v339 = vsel %vm316, %v300, 0
        %vm341 = vcmask 1041408
        %v343 = vsel %vm341, %v313, 0
        %345 = vmatprep.subr.bf16.mxu0 0
        %346 = vmatpush1.bf16.msra.mxu0 %v311
        %347 = vmatprep.subr.bf16.mxu0 0
        %348 = vmatpush1.bf16.msra.mxu0 %v312
        %349 = vmatprep.subr.bf16.mxu0 0
        %350 = vmatpush1.bf16.msra.mxu0 %v343
        %351 = vmatprep.subr.bf16.mxu0 0
        %352 = vmatpush1.bf16.msra.mxu0 0
        %353 = vmatprep.subr.bf16.mxu0 0
        %354 = vmatpush1.bf16.msra.mxu0 0
        %355 = vmatprep.subr.bf16.mxu0 0
        %356 = vmatpush1.bf16.msra.mxu0 0
        %357 = vmatprep.subr.bf16.mxu0 0
        %358 = vmatpush1.bf16.msra.mxu0 0
        %359 = vmatprep.subr.bf16.mxu0 0
        %360 = vmatpush1.bf16.msra.mxu0 0
        %361 = vmatprep.subr.bf16.mxu0 0
        %362 = vmatpush1.bf16.msra.mxu0 0
        %363 = vmatprep.subr.bf16.mxu0 0
        %364 = vmatpush1.bf16.msra.mxu0 0
        %365 = vmatprep.subr.bf16.mxu0 0
        %366 = vmatpush1.bf16.msra.mxu0 0
        %367 = vmatprep.subr.bf16.mxu0 0
        %368 = vmatpush1.bf16.msra.mxu0 0
        %369 = vmatprep.subr.bf16.mxu0 0
        %370 = vmatpush1.bf16.msra.mxu0 0
        %371 = vmatprep.subr.bf16.mxu0 0
        %372 = vmatpush1.bf16.msra.mxu0 0
        %373 = vmatprep.subr.bf16.mxu0 0
        %374 = vmatpush1.bf16.msra.mxu0 0
        %375 = vmatprep.subr.bf16.mxu0 0
        %376 = vmatpush1.bf16.msra.mxu0 0
        %377 = vmatprep.mubr.bf16.mxu0 0
        %378 = vmatmul.mubr.bf16.gmra.mrb[0].mxu0 %v318
        %v379 = vpop.f32.mrb[0].mxu0
        %v380 = vadd.f32 %v259, %v379
        %v381 = vpop.f32.mrb[0].mxu0
        %v382 = vpop.f32.mrb[0].mxu0
        %v383 = vadd.f32 %v259, %v382
        %v384 = vpop.f32.mrb[0].mxu0
        %385 = vmatprep.mubr.bf16.mxu0 0
        %386 = vmatmul.mubr.bf16.gmra.mrb[0].mxu0 %v321
        %v387 = vpop.f32.mrb[0].mxu0
        %v388 = vadd.f32 %v259, %v387
        %v389 = vpop.f32.mrb[0].mxu0
        %v390 = vpop.f32.mrb[0].mxu0
        %v391 = vadd.f32 %v259, %v390
        %v392 = vpop.f32.mrb[0].mxu0
        %393 = vmatprep.mubr.bf16.mxu0 0
        %394 = vmatmul.mubr.bf16.gmra.mrb[0].mxu0 %v324
        %v395 = vpop.f32.mrb[0].mxu0
        %v396 = vadd.f32 %v259, %v395
        %v397 = vpop.f32.mrb[0].mxu0
        %v398 = vpop.f32.mrb[0].mxu0
        %v399 = vadd.f32 %v259, %v398
        %v400 = vpop.f32.mrb[0].mxu0
        %401 = vmatprep.mubr.bf16.mxu0 0
        %402 = vmatmul.mubr.bf16.gmra.mrb[0].mxu0 %v327
        %v403 = vpop.f32.mrb[0].mxu0
        %v404 = vadd.f32 %v259, %v403
        %v405 = vpop.f32.mrb[0].mxu0
        %v406 = vpop.f32.mrb[0].mxu0
        %v407 = vadd.f32 %v259, %v406
        %v408 = vpop.f32.mrb[0].mxu0
        %409 = vmatprep.mubr.bf16.mxu0 0
        %410 = vmatmul.mubr.bf16.gmra.mrb[0].mxu0 %v330
        %v411 = vpop.f32.mrb[0].mxu0
        %v412 = vadd.f32 %v259, %v411
        %v413 = vpop.f32.mrb[0].mxu0
        %v414 = vpop.f32.mrb[0].mxu0
        %v415 = vadd.f32 %v259, %v414
        %v416 = vpop.f32.mrb[0].mxu0
        %417 = vmatprep.mubr.bf16.mxu0 0
        %418 = vmatmul.mubr.bf16.gmra.mrb[0].mxu0 %v333
        %v419 = vpop.f32.mrb[0].mxu0
        %v420 = vadd.f32 %v259, %v419
        %v421 = vpop.f32.mrb[0].mxu0
        %v422 = vpop.f32.mrb[0].mxu0
        %v423 = vadd.f32 %v259, %v422
        %v424 = vpop.f32.mrb[0].mxu0
        %425 = vmatprep.mubr.bf16.mxu0 0
        %426 = vmatmul.mubr.bf16.gmra.mrb[0].mxu0 %v336
        %v427 = vpop.f32.mrb[0].mxu0
        %v428 = vadd.f32 %v259, %v427
        %v429 = vpop.f32.mrb[0].mxu0
        %v430 = vpop.f32.mrb[0].mxu0
        %v431 = vadd.f32 %v259, %v430
        %v432 = vpop.f32.mrb[0].mxu0
        %433 = vmatprep.mubr.bf16.mxu0 0
        %434 = vmatmul.mubr.bf16.gmra.mrb[0].mxu0 %v339
        %v435 = vpop.f32.mrb[0].mxu0
        %v436 = vadd.f32 %v259, %v435
        %v437 = vpop.f32.mrb[0].mxu0
        %v438 = vpop.f32.mrb[0].mxu0
        %v439 = vadd.f32 %v259, %v438
        %v440 = vpop.f32.mrb[0].mxu0
        %441 = vdwg.mxu0
        %442 = vst [vmem:[%s214] sm:$0xff] %v380
        %443 = vst [vmem:[%s214 + $0x8] sm:$0xff] %v383
        %444 = vst [vmem:[%s214 + $0x10] sm:$0xff] %v388
        %445 = vst [vmem:[%s214 + $0x18] sm:$0xff] %v391
        %446 = vst [vmem:[%s214 + $0x20] sm:$0xff] %v396
        %447 = vst [vmem:[%s214 + $0x28] sm:$0xff] %v399
        %448 = vst [vmem:[%s214 + $0x30] sm:$0xff] %v404
        %449 = vst [vmem:[%s214 + $0x38] sm:$0xff] %v407
        %450 = vst [vmem:[%s214 + $0x40] sm:$0xff] %v412
        %451 = vst [vmem:[%s214 + $0x48] sm:$0xff] %v415
        %452 = vst [vmem:[%s214 + $0x50] sm:$0xff] %v420
        %453 = vst [vmem:[%s214 + $0x58] sm:$0xff] %v423
        %454 = vst [vmem:[%s214 + $0x60] sm:$0xff] %v428
        %455 = vst [vmem:[%s214 + $0x68] sm:$0xff] %v431
        %456 = vst [vmem:[%s214 + $0x70] sm:$0xff] %v436
        %457 = vst [vmem:[%s214 + $0x78] sm:$0xff] %v439
        %s458 = sadd.s32 %s26, %s27
        %s459 = smul.u32 %s458, 128
        %v460 = vlaneseq
        %v461 = vshrl.u32 %v460, 7
        %v462 = vadd.s32 %v461, 8
        %v463 = vadd.s32 %v461, 16
        %v464 = vadd.s32 %v461, 24
        %v465 = vadd.s32 %v461, 32
        %v466 = vadd.s32 %v461, 40
        %v467 = vadd.s32 %v461, 48
        %v468 = vadd.s32 %v461, 56
        %v469 = vadd.s32 %v461, 64
        %v470 = vadd.s32 %v461, 72
        %v471 = vadd.s32 %v461, 80
        %v472 = vadd.s32 %v461, 88
        %v473 = vadd.s32 %v461, 96
        %v474 = vadd.s32 %v461, 104
        %v475 = vadd.s32 %v461, 112
        %v476 = vadd.s32 %v461, 120
        %v477 = vstv %s459
        %v478 = vadd.s32 %v477, %v461
        %v479 = vadd.s32 %v477, %v462
        %v480 = vadd.s32 %v477, %v463
        %v481 = vadd.s32 %v477, %v464
        %v482 = vadd.s32 %v477, %v465
        %v483 = vadd.s32 %v477, %v466
        %v484 = vadd.s32 %v477, %v467
        %v485 = vadd.s32 %v477, %v468
        %v486 = vadd.s32 %v477, %v469
        %v487 = vadd.s32 %v477, %v470
        %v488 = vadd.s32 %v477, %v471
        %v489 = vadd.s32 %v477, %v472
        %v490 = vadd.s32 %v477, %v473
        %v491 = vadd.s32 %v477, %v474
        %v492 = vadd.s32 %v477, %v475
        %v493 = vadd.s32 %v477, %v476
        %vm494 = vcmp.lt.s32.totalorder %v478, 256
        %vm495 = vcmp.lt.s32.totalorder %v479, 256
        %vm496 = vcmp.lt.s32.totalorder %v480, 256
        %vm497 = vcmp.lt.s32.totalorder %v481, 256
        %vm498 = vcmp.lt.s32.totalorder %v482, 256
        %vm499 = vcmp.lt.s32.totalorder %v483, 256
        %vm500 = vcmp.lt.s32.totalorder %v484, 256
        %vm501 = vcmp.lt.s32.totalorder %v485, 256
        %vm502 = vcmp.lt.s32.totalorder %v486, 256
        %vm503 = vcmp.lt.s32.totalorder %v487, 256
        %vm504 = vcmp.lt.s32.totalorder %v488, 256
        %vm505 = vcmp.lt.s32.totalorder %v489, 256
        %vm506 = vcmp.lt.s32.totalorder %v490, 256
        %vm507 = vcmp.lt.s32.totalorder %v491, 256
        %vm508 = vcmp.lt.s32.totalorder %v492, 256
        %vm509 = vcmp.lt.s32.totalorder %v493, 256
        %v510 = vsel %vm494, 1, 0
        %v511 = vsel %vm495, 1, 0
        %v512 = vsel %vm496, 1, 0
        %v513 = vsel %vm497, 1, 0
        %v514 = vsel %vm498, 1, 0
        %v515 = vsel %vm499, 1, 0
        %v516 = vsel %vm500, 1, 0
        %v517 = vsel %vm501, 1, 0
        %v518 = vsel %vm502, 1, 0
        %v519 = vsel %vm503, 1, 0
        %v520 = vsel %vm504, 1, 0
        %v521 = vsel %vm505, 1, 0
        %v522 = vsel %vm506, 1, 0
        %v523 = vsel %vm507, 1, 0
        %v524 = vsel %vm508, 1, 0
        %v525 = vsel %vm509, 1, 0
        %vm526 = vcmp.eq.s32.totalorder %v510, 1
        %vm527 = vcmp.eq.s32.totalorder %v511, 1
        %vm528 = vcmp.eq.s32.totalorder %v512, 1
        %vm529 = vcmp.eq.s32.totalorder %v513, 1
        %vm530 = vcmp.eq.s32.totalorder %v514, 1
        %vm531 = vcmp.eq.s32.totalorder %v515, 1
        %vm532 = vcmp.eq.s32.totalorder %v516, 1
        %vm533 = vcmp.eq.s32.totalorder %v517, 1
        %vm534 = vcmp.eq.s32.totalorder %v518, 1
        %vm535 = vcmp.eq.s32.totalorder %v519, 1
        %vm536 = vcmp.eq.s32.totalorder %v520, 1
        %vm537 = vcmp.eq.s32.totalorder %v521, 1
        %vm538 = vcmp.eq.s32.totalorder %v522, 1
        %vm539 = vcmp.eq.s32.totalorder %v523, 1
        %vm540 = vcmp.eq.s32.totalorder %v524, 1
        %vm541 = vcmp.eq.s32.totalorder %v525, 1
        %v542 = vsel %vm526, %v380, 0.0
        %v543 = vsel %vm527, %v383, 0.0
        %v544 = vsel %vm528, %v388, 0.0
        %v545 = vsel %vm529, %v391, 0.0
        %v546 = vsel %vm530, %v396, 0.0
        %v547 = vsel %vm531, %v399, 0.0
        %v548 = vsel %vm532, %v404, 0.0
        %v549 = vsel %vm533, %v407, 0.0
        %v550 = vsel %vm534, %v412, 0.0
        %v551 = vsel %vm535, %v415, 0.0
        %v552 = vsel %vm536, %v420, 0.0
        %v553 = vsel %vm537, %v423, 0.0
        %v554 = vsel %vm538, %v428, 0.0
        %v555 = vsel %vm539, %v431, 0.0
        %v556 = vsel %vm540, %v436, 0.0
        %v557 = vsel %vm541, %v439, 0.0
        %p558 = scmp.eq.s32.totalorder %s27, 0
        // Predicated region
        $region33: #{tpu_custom_call.1} parent=31 // pred_check
          %p559 = pneg %p558
        $region34: #{tpu_custom_call.1} parent=31 // pred_check_branch
          %561 = sbr.rel (%p559) target = $region36
        $region35: #{tpu_custom_call.1} parent=31 // pred_region
          %562 = vst [vmem:[#allocation2] sm:$0x3] 0.0
        $region36: #{tpu_custom_call.1} parent=31 // pred_fallthru
          _
        %v563 = vld [vmem:[#allocation2] sm:$0x3]
        %v564 = vadd.f32 %v542, %v543
        %v565 = vadd.f32 %v564, %v544
        %v566 = vadd.f32 %v565, %v545
        %v567 = vadd.f32 %v566, %v546
        %v568 = vadd.f32 %v567, %v547
        %v569 = vadd.f32 %v568, %v548
        %v570 = vadd.f32 %v569, %v549
        %v571 = vadd.f32 %v570, %v550
        %v572 = vadd.f32 %v571, %v551
        %v573 = vadd.f32 %v572, %v552
        %v574 = vadd.f32 %v573, %v553
        %v575 = vadd.f32 %v574, %v554
        %v576 = vadd.f32 %v575, %v555
        %v577 = vadd.f32 %v576, %v556
        %v578 = vadd.f32 %v577, %v557
        %v579 = vrot.slane %v578, 4
        %v580 = vadd.f32 %v578, %v579
        %v581 = vrot.slane %v580, 2
        %v582 = vadd.f32 %v580, %v581
        %v583 = vrot.slane %v582, 1
        %v584 = vadd.f32 %v582, %v583
        %v585 = vmul.f32 %v542, %v542
        %v586 = vmul.f32 %v543, %v543
        %v587 = vmul.f32 %v544, %v544
        %v588 = vmul.f32 %v545, %v545
        %v589 = vmul.f32 %v546, %v546
        %v590 = vmul.f32 %v547, %v547
        %v591 = vmul.f32 %v548, %v548
        %v592 = vmul.f32 %v549, %v549
        %v593 = vmul.f32 %v550, %v550
        %v594 = vmul.f32 %v551, %v551
        %v595 = vmul.f32 %v552, %v552
        %v596 = vmul.f32 %v553, %v553
        %v597 = vmul.f32 %v554, %v554
        %v598 = vmul.f32 %v555, %v555
        %v599 = vmul.f32 %v556, %v556
        %v600 = vmul.f32 %v557, %v557
        %v601 = vadd.f32 %v585, %v586
        %v602 = vadd.f32 %v601, %v587
        %v603 = vadd.f32 %v602, %v588
        %v604 = vadd.f32 %v603, %v589
        %v605 = vadd.f32 %v604, %v590
        %v606 = vadd.f32 %v605, %v591
        %v607 = vadd.f32 %v606, %v592
        %v608 = vadd.f32 %v607, %v593
        %v609 = vadd.f32 %v608, %v594
        %v610 = vadd.f32 %v609, %v595
        %v611 = vadd.f32 %v610, %v596
        %v612 = vadd.f32 %v611, %v597
        %v613 = vadd.f32 %v612, %v598
        %v614 = vadd.f32 %v613, %v599
        %v615 = vadd.f32 %v614, %v600
        %v616 = vrot.slane %v615, 4
        %v617 = vadd.f32 %v615, %v616
        %v618 = vrot.slane %v617, 2
        %v619 = vadd.f32 %v617, %v618
        %v620 = vrot.slane %v619, 1
        %v621 = vadd.f32 %v619, %v620
        %vm622 = vcmask 1040384
        %v623 = vsel %vm622, %v584, %v621
        %v624 = vadd.f32 %v563, %v623
        %625 = vst [vmem:[#allocation2] sm:$0x3] %v624
        // Predicated region
        $region37: #{tpu_custom_call.1} parent=31 // pred_check
          %p626 = pneg %p558
        $region38: #{tpu_custom_call.1} parent=31 // pred_check_branch
          %628 = sbr.rel (%p626) target = $region40
        $region39: #{tpu_custom_call.1} parent=31 // pred_region
          %v629 = vld [vmem:[#allocation2] sm:$0x3]
          %630 = vst [vmem:[%s221] sm:$0x3] %v629
        $region40: #{tpu_custom_call.1} parent=31 // pred_fallthru
          _
        %s631 = sand.u32 %s114, 1
        %s632 = scalar_lea.sflag [#allocation4], %s631
        %s633 = sand.u32 %s114, 1
        %s634 = smul.addr %s633, 128
        %s635 = scalar_lea.vmem [#allocation3], %s634
        %s636 = sand.u32 %s140, 1
        %s637 = scalar_lea.sflag [#allocation6], %s636
        %s638 = sand.u32 %s140, 1
        %s639 = smul.addr %s638, 2
        %s640 = scalar_lea.vmem [#allocation5], %s639
        // Predicated region
        $region41: #{tpu_custom_call.1} parent=31 // pred_check
          %p641 = pneg %p124
        $region42: #{tpu_custom_call.1} parent=31 // pred_check_branch
          %643 = sbr.rel (%p641) target = $region44
        $region43: #{tpu_custom_call.1} parent=31 // pred_region
          %s644 = sadd.s32 %s26, %s27
          %s645 = smul.u32 16, %s644
          %s647 = ssub.s32 2048, 2048
          %648 = vsyncadd %s632, %s647
          %s649 = smul.addr %s645, 128
          %s650 = scalar_lea.hbm %s3, %s649
          %s651 = sshll.u32 %s635, 4
          %s652 = int_to_ptr.vmem [resolvable:$true] %s651
          %657 = dma.vmem_to_hbm [thread:$0]  %s652, 2048, %s650, %s632, 128, 128, 8
        $region44: #{tpu_custom_call.1} parent=31 // pred_fallthru
          _
        // Predicated region
        $region45: #{tpu_custom_call.1} parent=31 // pred_check
          %p658 = pneg %p150
        $region46: #{tpu_custom_call.1} parent=31 // pred_check_branch
          %660 = sbr.rel (%p658) target = $region48
        $region47: #{tpu_custom_call.1} parent=31 // pred_region
          %s662 = ssub.s32 32, 32
          %663 = vsyncadd %s637, %s662
          %s664 = smul.addr %s26, 32
          %s665 = scalar_lea.hbm %s4, %s664
          %s667 = sshll.u32 %s640, 4
          %s668 = int_to_ptr.vmem [resolvable:$true] %s667
          %670 = dma.vmem_to_hbm [thread:$0]  %s668, 32, %s665, %s637
        $region48: #{tpu_custom_call.1} parent=31 // pred_fallthru
          _
      $region32: #{tpu_custom_call.1} parent=5 // pred_fallthru
        _
      %p671 = scmp.le.s32.totalorder 2, %s17
      // Predicated region
      $region49: #{tpu_custom_call.1} parent=5 // pred_check
        %p672 = pneg %p671
      $region50: #{tpu_custom_call.1} parent=5 // pred_check_branch
        %674 = sbr.rel (%p672) target = $region52
      $region51: #{tpu_custom_call.1} parent=5 // pred_region
        %s675 = ssub.s32 %s17, 2
        // Predicated region
        $region53: #{tpu_custom_call.1} parent=51 // pred_check
          %p676 = pneg %p130
        $region54: #{tpu_custom_call.1} parent=51 // pred_check_branch
          %678 = sbr.rel (%p676) target = $region56
        $region55: #{tpu_custom_call.1} parent=51 // pred_region
          %s679 = sand.u32 %s115, 1
          %s680 = scalar_lea.sflag [#allocation4], %s679
          %s681 = sand.u32 %s115, 1
          %s682 = smul.addr %s681, 128
          %s683 = scalar_lea.vmem [#allocation3], %s682
          %684 = dma.done %s680, 2048
        $region56: #{tpu_custom_call.1} parent=51 // pred_fallthru
          _
        // Predicated region
        $region57: #{tpu_custom_call.1} parent=51 // pred_check
          %p685 = pneg %p156
        $region58: #{tpu_custom_call.1} parent=51 // pred_check_branch
          %687 = sbr.rel (%p685) target = $region60
        $region59: #{tpu_custom_call.1} parent=51 // pred_region
          %s688 = sand.u32 %s141, 1
          %s689 = scalar_lea.sflag [#allocation6], %s688
          %s690 = sand.u32 %s141, 1
          %s691 = smul.addr %s690, 2
          %s692 = scalar_lea.vmem [#allocation5], %s691
          %693 = dma.done %s689, 32
        $region60: #{tpu_custom_call.1} parent=51 // pred_fallthru
          _
      $region52: #{tpu_custom_call.1} parent=5 // pred_fallthru
        _
    $region6: #{tpu_custom_call.1} parent=1 // loop_footer
      %s21 = sadd.s32 1, %s17
    $region7: #{tpu_custom_call.1} parent=1 // loop_footer_branch
      %16 = sbr.rel target = $region3
    $region8: #{tpu_custom_call.1} parent=1 // loop_exit
      _
    %694 = vsyncpa [#allocation4], 1
    %s695 = scalar_lea.sflag [#allocation4], 1
    %696 = vsyncpa %s695, 1
    %697 = vsyncpa [#allocation6], 1
    %s698 = scalar_lea.sflag [#allocation6], 1
    %699 = vsyncpa %s698, 1

</llo_original>
